<compile_context>
chip_gen: v7x
topology: tpu7x:2x2x1
jax: 0.10.0
libtpu: 0.0.40
codegen_flags: <defaults>
</compile_context>

<pallas_src>
import numpy as np
import jax
import jax.numpy as jnp
from jax import lax
from jax.experimental import pallas as pl
from jax.experimental.pallas import tpu as pltpu

# Scaled-down dims.  H is kept at the real 128 so gate slices / lane widths
# match the real kernel; T=256 so the chunked LSTM grid, the lane-dense
# (Bb, Tc=128) output blocks and the h/c carry are actually exercised.
B, C1, D_IN, T, H = 32, 8, 256, 256, 128
EPS = 1e-5

# Tile sizes (toy values; real-scale guidance in comments).
FC1_TM = 128     # >= 256 at real m_rows = 64*101 (pad M to a 256-multiple)
FC1_TN = 128     # real T=1375 -> pad to 1408
FC1_TK = 128     # real D_IN=5511 -> pad to 5632; ~1024 per tile in bf16
LSTM_TC = 128    # time chunk: ~128 on v5e/v6e, 32-64 on v7x (64 MiB VMEM)
LSTM_BG = 2      # batch grid blocks: 2 on v7x to use both TensorCores
# Raise the scoped-VMEM limit above the 32 MiB (v6e/v7x) / 16 MiB (v5e)
# default; 48 MiB is safe on every generation (<= ~52 MiB budget on v7x,
# use ~96-100 MiB on v5e/v6e when enlarging blocks further).
VMEM_LIMIT = 48 * 1024 * 1024


# --------------------------------------------------------------------------
# Kernel 1: fc1 + folded eval-mode BatchNorm1d(C1) + ReLU.
# Batch folded into M; full (M, N, K) tiling with an f32 accumulator;
# bf16 operands, bf16 lane-dense output.
# --------------------------------------------------------------------------
def fc1_bn_relu_kernel(x_ref, w1_ref, b1_ref, bn_ref, o_ref, acc_ref):
    # x_ref:  (tm, tk) bf16        w1_ref: (tk, tn) bf16
    # b1_ref: (1, tn)  f32         bn_ref: (tm, 2) f32  [:,0]=scale [:,1]=shift
    # o_ref:  (tm, tn) bf16        acc_ref: (tm, tn) f32 scratch
    k = pl.program_id(2)

    @pl.when(k == 0)
    def _():
        acc_ref[...] = jnp.zeros_like(acc_ref)

    acc_ref[...] += jnp.dot(x_ref[...], w1_ref[...],
                            preferred_element_type=jnp.float32)

    @pl.when(k == pl.num_programs(2) - 1)
    def _():
        scale = bn_ref[:, 0:1]                       # per-row folded bn1 scale
        shift = bn_ref[:, 1:2]                       # per-row folded bn1 shift
        y = (acc_ref[...] + b1_ref[...]) * scale + shift
        o_ref[...] = jnp.maximum(y, 0.0).astype(o_ref.dtype)


# --------------------------------------------------------------------------
# Kernel 2: time-chunked batched LSTM recurrence with bn2 (reshape-remapped)
# + fc2 + sigmoid fused as a per-chunk (vectorized) epilogue.
# --------------------------------------------------------------------------
def lstm_bn2_fc2_kernel(x_ref, wih_ref, whh_ref, b_ref, w2e_ref, b2e_ref,
                        o_ref, gx_sc, hs_sc, h_sc, c_sc):
    # grid = (B/Bb "parallel", T/Tc "arbitrary"); h/c carried in scratch
    # across the (innermost) time axis, re-initialised at chunk 0.
    # x_ref:   (Tc, Bb, C1) bf16  time-major activation chunk
    # wih_ref: (C1, 4H) bf16      whh_ref: (H, 4H) f32     b_ref: (1, 4H) f32
    # w2e_ref: (Tc, H) f32  effective fc2 weight (bn2 folded, reshape-remapped)
    # b2e_ref: (Tc, 1) f32  effective fc2 bias   (bn2 shift folded through w2)
    # o_ref:   (Bb, Tc) f32 lane-dense sigmoid output block
    # scratch: gx (Tc*Bb, 4H) f32, hs (Tc, Bb, H) f32, h/c (Bb, H) f32
    t_chunk, bsz, _ = x_ref.shape
    hid = whh_ref.shape[0]

    @pl.when(pl.program_id(1) == 0)
    def _():
        h_sc[...] = jnp.zeros_like(h_sc)
        c_sc[...] = jnp.zeros_like(c_sc)

    # Input-to-hidden contribution for the whole chunk in ONE bf16 MXU matmul,
    # off the serial recurrence path.  The chunk is already time-major, so
    # this is a free leading-dim collapse and every step below reads a
    # contiguous (Bb, 4H) slab of gx.
    xt = x_ref[...].reshape(t_chunk * bsz, x_ref.shape[-1])        # (Tc*Bb, C1)
    gx_sc[...] = (
        jnp.dot(xt, wih_ref[...], preferred_element_type=jnp.float32)
        + b_ref[...]
    )

    def step(tl, carry):
        row = pl.multiple_of(tl * bsz, bsz)
        # Batched recurrence: one (Bb, H) @ (H, 4H) matmul per timestep.
        # (v5e extra headroom: pin whh on the MXU once per chunk via
        #  pltpu.matmul_push_rhs / matmul_acc_lhs / matmul_pop.)
        gates = gx_sc[pl.ds(row, bsz), :] + jnp.dot(
            h_sc[...], whh_ref[...], preferred_element_type=jnp.float32)
        # PyTorch nn.LSTM gate order i, f, g, o; exact 128-lane slices.
        i = jax.nn.sigmoid(gates[:, 0 * hid:1 * hid])
        f = jax.nn.sigmoid(gates[:, 1 * hid:2 * hid])
        g = jnp.tanh(gates[:, 2 * hid:3 * hid])
        o = jax.nn.sigmoid(gates[:, 3 * hid:4 * hid])
        c_new = f * c_sc[...] + i * g
        h_new = o * jnp.tanh(c_new)
        c_sc[...] = c_new
        h_sc[...] = h_new
        # Only a contiguous (1, Bb, H) store on the serial path; the fc2
        # epilogue is batched per chunk below.
        hs_sc[pl.ds(tl, 1), :, :] = h_new[None]
        return carry

    # Partial unroll (4): LLO scheduling visibility without blowing up vreg
    # live ranges at real T=1375.
    lax.fori_loop(0, t_chunk, step, 0, unroll=4)

    # Chunk epilogue (off the serial path): bn2 (folded into w2e/b2e) + fc2 +
    # sigmoid for all Tc steps at once, emitted as a lane-dense (Bb, Tc) block.
    logits = jnp.sum(hs_sc[...] * w2e_ref[...][:, None, :], axis=-1)  # (Tc, Bb)
    probs = jax.nn.sigmoid(logits + b2e_ref[...])
    o_ref[...] = jnp.transpose(probs, (1, 0)).astype(o_ref.dtype)


# --------------------------------------------------------------------------
# One-time parameter folding / pre-transposition / bf16 casting
# (NOT done per forward call).
# --------------------------------------------------------------------------
def fold_params(p, batch_size):
    f32, bf16 = jnp.float32, jnp.bfloat16

    # bn1 (eval) folded to per-row scale/shift (row m = b*C1 + c -> channel c),
    # packed into a single (B*C1, 2) side input.
    scale1 = p["bn1_gamma"] / jnp.sqrt(p["bn1_var"] + EPS)
    shift1 = p["bn1_beta"] - p["bn1_mean"] * scale1
    bn1_rows = jnp.stack(
        [jnp.tile(scale1, batch_size), jnp.tile(shift1, batch_size)], axis=1)

    # bn2 (eval) folded THROUGH the two torch.reshape shuffles into fc2:
    # LSTM output element (t, h) hits bn2 channel (t*H + h) // T.
    scale2 = p["bn2_gamma"] / jnp.sqrt(p["bn2_var"] + EPS)
    shift2 = p["bn2_beta"] - p["bn2_mean"] * scale2
    chan = (jnp.arange(T)[:, None] * H + jnp.arange(H)[None, :]) // T   # (T,H)
    w2_eff = scale2[chan] * p["w2"][0][None, :]                         # (T,H)
    b2_eff = (shift2[chan] @ p["w2"][0] + p["b2"][0])[:, None]          # (T,1)

    return {
        "w1_t": p["w1"].T.astype(bf16),                            # (D_IN, T)
        "b1_row": p["b1"][None, :].astype(f32),                    # (1, T)
        "bn1_rows": bn1_rows.astype(f32),                          # (B*C1, 2)
        "wih_t": p["lstm_w_ih"].T.astype(bf16),                    # (C1, 4H)
        "whh_t": p["lstm_w_hh"].T.astype(f32),                     # (H, 4H)
        "b_lstm": (p["lstm_b_ih"] + p["lstm_b_hh"])[None, :].astype(f32),
        "w2_eff": w2_eff.astype(f32),                              # (T, H)
        "b2_eff": b2_eff.astype(f32),                              # (T, 1)
    }


# --------------------------------------------------------------------------
# Forward wrapper
# --------------------------------------------------------------------------
def net_v2_forward(x, fp):
    f32, bf16 = jnp.float32, jnp.bfloat16
    bsz = x.shape[0]
    m_rows = bsz * C1
    tm, tn, tk, tc, nb = FC1_TM, FC1_TN, FC1_TK, LSTM_TC, LSTM_BG
    bb = bsz // nb
    assert m_rows % tm == 0 and T % tn == 0 and D_IN % tk == 0
    assert T % tc == 0 and bsz % nb == 0 and bb % 16 == 0   # bf16 sublane tile

    # ---- fc1 + bn1(eval) + relu: tiled (M, N, K) bf16 matmul ---------------
    x2d = jnp.reshape(x, (m_rows, D_IN)).astype(bf16)
    y1 = pl.pallas_call(
        fc1_bn_relu_kernel,
        grid=(m_rows // tm, T // tn, D_IN // tk),
        in_specs=[
            pl.BlockSpec((tm, tk), lambda i, j, k: (i, k)),
            pl.BlockSpec((tk, tn), lambda i, j, k: (k, j)),
            pl.BlockSpec((1, tn), lambda i, j, k: (0, j)),
            pl.BlockSpec((tm, 2), lambda i, j, k: (i, 0)),
        ],
        out_specs=pl.BlockSpec((tm, tn), lambda i, j, k: (i, j)),
        out_shape=jax.ShapeDtypeStruct((m_rows, T), bf16),
        scratch_shapes=[pltpu.VMEM((tm, tn), f32)],
        compiler_params=pltpu.CompilerParams(
            dimension_semantics=("parallel", "parallel", "arbitrary"),
            vmem_limit_bytes=VMEM_LIMIT),
    )(x2d, fp["w1_t"], fp["b1_row"], fp["bn1_rows"])

    # torch.reshape(x, (B, T, C1)) is a flat reinterpretation (no transpose in
    # PyTorch), but on TPU it is an unavoidable physical relayout.  The
    # time-major transpose the LSTM kernel wants is folded into that SAME
    # single XLA copy (reshape + transpose fuse), so there is no standalone
    # extra HBM round trip for the layout change.
    x_tm = jnp.transpose(jnp.reshape(y1, (bsz, T, C1)), (1, 0, 2))   # (T,B,C1)

    # ---- fused LSTM + bn2 + fc2 + sigmoid ----------------------------------
    out2d = pl.pallas_call(
        lstm_bn2_fc2_kernel,
        grid=(nb, T // tc),
        in_specs=[
            pl.BlockSpec((tc, bb, C1), lambda b, t: (t, b, 0)),
            pl.BlockSpec((C1, 4 * H), lambda b, t: (0, 0)),
            pl.BlockSpec((H, 4 * H), lambda b, t: (0, 0)),
            pl.BlockSpec((1, 4 * H), lambda b, t: (0, 0)),
            pl.BlockSpec((tc, H), lambda b, t: (t, 0)),
            pl.BlockSpec((tc, 1), lambda b, t: (t, 0)),
        ],
        out_specs=pl.BlockSpec((bb, tc), lambda b, t: (b, t)),
        out_shape=jax.ShapeDtypeStruct((bsz, T), f32),
        scratch_shapes=[
            pltpu.VMEM((tc * bb, 4 * H), f32),   # gx, time-major
            pltpu.VMEM((tc, bb, H), f32),        # per-step hidden states
            pltpu.VMEM((bb, H), f32),            # h carry (across time chunks)
            pltpu.VMEM((bb, H), f32),            # c carry
        ],
        compiler_params=pltpu.CompilerParams(
            dimension_semantics=("parallel", "arbitrary"),
            vmem_limit_bytes=VMEM_LIMIT),
    )(x_tm, fp["wih_t"], fp["whh_t"], fp["b_lstm"],
      fp["w2_eff"], fp["b2_eff"])

    # TODO(synk): nn.Dropout(p=0.2) is eval-mode identity here; training-mode
    # random masking is not implemented.
    return out2d[:, :, None]                     # (B, T, 1)


# --------------------------------------------------------------------------
# Deterministic parameter init (torch-Linear-like uniform bounds; BN params
# randomized so the folds are actually exercised by the check).
# --------------------------------------------------------------------------
def init_params(key):
    ks = jax.random.split(key, 16)
    u = lambda k, shape, bound: jax.random.uniform(
        k, shape, jnp.float32, -bound, bound)
    n = lambda k, shape: jax.random.normal(k, shape, jnp.float32)
    p = {}
    p["w1"] = u(ks[0], (T, D_IN), 1.0 / (D_IN ** 0.5))
    p["b1"] = u(ks[1], (T,), 1.0 / (D_IN ** 0.5))
    p["bn1_gamma"] = 1.0 + 0.1 * n(ks[2], (C1,))
    p["bn1_beta"] = 0.1 * n(ks[3], (C1,))
    p["bn1_mean"] = 0.1 * n(ks[4], (C1,))
    p["bn1_var"] = 1.0 + 0.1 * jax.random.uniform(ks[5], (C1,), jnp.float32)
    p["lstm_w_ih"] = u(ks[6], (4 * H, C1), 1.0 / (H ** 0.5))
    p["lstm_w_hh"] = u(ks[7], (4 * H, H), 1.0 / (H ** 0.5))
    p["lstm_b_ih"] = u(ks[8], (4 * H,), 1.0 / (H ** 0.5))
    p["lstm_b_hh"] = u(ks[9], (4 * H,), 1.0 / (H ** 0.5))
    p["bn2_gamma"] = 1.0 + 0.1 * n(ks[10], (H,))
    p["bn2_beta"] = 0.1 * n(ks[11], (H,))
    p["bn2_mean"] = 0.1 * n(ks[12], (H,))
    p["bn2_var"] = 1.0 + 0.1 * jax.random.uniform(ks[13], (H,), jnp.float32)
    p["w2"] = u(ks[14], (1, H), 1.0 / (H ** 0.5))
    p["b2"] = u(ks[15], (1,), 1.0 / (H ** 0.5))
    return p


# --------------------------------------------------------------------------
# Pure-JAX reference.  Same eval-mode semantics as the PyTorch module; it
# mirrors the kernel's intentional bf16 operand casts (fc1 / input-to-hidden
# matmuls and the stored activation) so the check can be tight (2e-4, ~100x
# tighter than before).  Replacing bf16 with f32 everywhere recovers exact
# PyTorch-f32 semantics (then compare at ~1e-2).
# --------------------------------------------------------------------------
def reference_forward(x, p):
    bsz = x.shape[0]
    bf16 = jnp.bfloat16

    y = jnp.einsum("bcd,td->bct", x.astype(bf16), p["w1"].astype(bf16),
                   preferred_element_type=jnp.float32) + p["b1"]
    scale1 = p["bn1_gamma"] / jnp.sqrt(p["bn1_var"] + EPS)
    shift1 = p["bn1_beta"] - p["bn1_mean"] * scale1
    y = jnp.maximum(y * scale1[None, :, None] + shift1[None, :, None], 0.0)
    y = jnp.reshape(y.astype(bf16), (bsz, T, C1))   # torch.reshape (flat)

    wih = p["lstm_w_ih"].astype(bf16)
    whh = p["lstm_w_hh"]
    bias = p["lstm_b_ih"] + p["lstm_b_hh"]

    def step(carry, x_t):
        h, c = carry
        gates = (jnp.dot(x_t, wih.T, preferred_element_type=jnp.float32)
                 + h @ whh.T + bias)
        i, f, g, o = jnp.split(gates, 4, axis=-1)
        i, f, o = jax.nn.sigmoid(i), jax.nn.sigmoid(f), jax.nn.sigmoid(o)
        g = jnp.tanh(g)
        c = f * c + i * g
        h = o * jnp.tanh(c)
        return (h, c), h

    h0 = jnp.zeros((bsz, H), jnp.float32)
    c0 = jnp.zeros((bsz, H), jnp.float32)
    _, hs = lax.scan(step, (h0, c0), jnp.swapaxes(y, 0, 1))
    y = jnp.swapaxes(hs, 0, 1)                      # (B, T, H)

    y = jnp.reshape(y, (bsz, H, T))                 # torch.reshape (flat)
    scale2 = p["bn2_gamma"] / jnp.sqrt(p["bn2_var"] + EPS)
    shift2 = p["bn2_beta"] - p["bn2_mean"] * scale2
    y = y * scale2[None, :, None] + shift2[None, :, None]
    y = jnp.reshape(y, (bsz, T, H))                 # torch.reshape (flat)
    return jax.nn.sigmoid(y @ p["w2"].T + p["b2"])


if __name__ == "__main__":
    key = jax.random.PRNGKey(0)
    kx, kp = jax.random.split(key)
    x = jax.random.normal(kx, (B, C1, D_IN), jnp.float32)
    params = init_params(kp)
    folded = fold_params(params, B)

    out = net_v2_forward(x, folded)
    out = jax.block_until_ready(out)
    assert out.shape == (B, T, 1), out.shape

    ref = reference_forward(x, params)
    np.testing.assert_allclose(
        np.asarray(out), np.asarray(ref), atol=2e-4, rtol=2e-4)
    print("KERNEL_OK")
</pallas_src>

<mosaic_0001>
module attributes {stable_mosaic.version = 11 : i64} {
  func.func @fc1_bn_relu_kernel(%arg0: i32, %arg1: i32, %arg2: i32, %arg3: memref<128x128xbf16, #tpu.memory_space<vmem>>, %arg4: memref<128x128xbf16, #tpu.memory_space<vmem>>, %arg5: memref<1x128xf32, #tpu.memory_space<vmem>>, %arg6: memref<128x2xf32, #tpu.memory_space<vmem>>, %arg7: memref<128x128xbf16, #tpu.memory_space<vmem>>, %arg8: memref<128x128xf32, #tpu.memory_space<vmem>>) attributes {dimension_semantics = [#tpu.dimension_semantics<parallel>, #tpu.dimension_semantics<parallel>, #tpu.dimension_semantics<arbitrary>], iteration_bounds = array<i64: 2, 2, 2>, scalar_prefetch = 0 : i64, scratch_operands = 1 : i64, tpu.core_type = #tpu.core_type<tc>, window_params = [{transform_indices = @transform_0, window_bounds = array<i64: 128, 128>}, {transform_indices = @transform_1, window_bounds = array<i64: 128, 128>}, {transform_indices = @transform_2, window_bounds = array<i64: 1, 128>}, {transform_indices = @transform_3, window_bounds = array<i64: 128, 2>}, {transform_indices = @transform_4, window_bounds = array<i64: 128, 128>}]} {
    %c0_i32 = arith.constant 0 : i32
    %0 = arith.cmpi eq, %arg2, %c0_i32 : i32
    %1 = arith.extui %0 : i1 to i32
    %c0_i32_0 = arith.constant 0 : i32
    %2 = arith.cmpi ne, %1, %c0_i32_0 : i32
    scf.if %2 {
      %cst_9 = arith.constant 0.000000e+00 : f32
      %12 = vector.broadcast %cst_9 : f32 to vector<128x128xf32>
      %c0_10 = arith.constant 0 : index
      %c0_11 = arith.constant 0 : index
      %13 = vector.load %arg8[%c0_10, %c0_11] : memref<128x128xf32, #tpu.memory_space<vmem>>, vector<128x128xf32>
      tpu.vector_store %arg8[%c0_10, %c0_11], %12 {strides = array<i32>} : memref<128x128xf32, #tpu.memory_space<vmem>>, vector<128x128xf32>,
    } else {
    }
    %c0 = arith.constant 0 : index
    %c0_1 = arith.constant 0 : index
    %3 = vector.load %arg8[%c0, %c0_1] : memref<128x128xf32, #tpu.memory_space<vmem>>, vector<128x128xf32>
    %c0_2 = arith.constant 0 : index
    %c0_3 = arith.constant 0 : index
    %4 = vector.load %arg3[%c0_2, %c0_3] : memref<128x128xbf16, #tpu.memory_space<vmem>>, vector<128x128xbf16>
    %c0_4 = arith.constant 0 : index
    %c0_5 = arith.constant 0 : index
    %5 = vector.load %arg4[%c0_4, %c0_5] : memref<128x128xbf16, #tpu.memory_space<vmem>>, vector<128x128xbf16>
    %cst = arith.constant dense<0.000000e+00> : vector<128x128xf32>
    %6 = tpu.matmul %4, %5, %cst {dimension_numbers = #tpu.dot_dimension_numbers<[1], [0], [0], [1], [0, 0, 1, 1], [], []>} : vector<128x128xbf16>, vector<128x128xbf16>, vector<128x128xf32> -> vector<128x128xf32>
    %7 = arith.addf %3, %6 : vector<128x128xf32>
    %c0_6 = arith.constant 0 : index
    %c0_7 = arith.constant 0 : index
    %8 = vector.load %arg8[%c0_6, %c0_7] : memref<128x128xf32, #tpu.memory_space<vmem>>, vector<128x128xf32>
    tpu.vector_store %arg8[%c0_6, %c0_7], %7 {strides = array<i32>} : memref<128x128xf32, #tpu.memory_space<vmem>>, vector<128x128xf32>,
    %c1_i32 = arith.constant 1 : i32
    %9 = arith.cmpi eq, %arg2, %c1_i32 : i32
    %10 = arith.extui %9 : i1 to i32
    %c0_i32_8 = arith.constant 0 : i32
    %11 = arith.cmpi ne, %10, %c0_i32_8 : i32
    scf.if %11 {
      %c0_9 = arith.constant 0 : index
      %c0_10 = arith.constant 0 : index
      %12 = vector.load %arg6[%c0_9, %c0_10] : memref<128x2xf32, #tpu.memory_space<vmem>>, vector<128x1xf32>
      %c0_11 = arith.constant 0 : index
      %c1 = arith.constant 1 : index
      %13 = vector.load %arg6[%c0_11, %c1] : memref<128x2xf32, #tpu.memory_space<vmem>>, vector<128x1xf32>
      %c0_12 = arith.constant 0 : index
      %c0_13 = arith.constant 0 : index
      %14 = vector.load %arg8[%c0_12, %c0_13] : memref<128x128xf32, #tpu.memory_space<vmem>>, vector<128x128xf32>
      %c0_14 = arith.constant 0 : index
      %c0_15 = arith.constant 0 : index
      %15 = vector.load %arg5[%c0_14, %c0_15] : memref<1x128xf32, #tpu.memory_space<vmem>>, vector<1x128xf32>
      %16 = vector.broadcast %15 : vector<1x128xf32> to vector<128x128xf32>
      %17 = arith.addf %14, %16 : vector<128x128xf32>
      %18 = vector.broadcast %12 : vector<128x1xf32> to vector<128x128xf32>
      %19 = arith.mulf %17, %18 : vector<128x128xf32>
      %20 = vector.broadcast %13 : vector<128x1xf32> to vector<128x128xf32>
      %21 = arith.addf %19, %20 : vector<128x128xf32>
      %cst_16 = arith.constant 0.000000e+00 : f32
      %22 = vector.broadcast %cst_16 : f32 to vector<128x128xf32>
      %23 = arith.maximumf %21, %22 : vector<128x128xf32>
      %24 = arith.truncf %23 : vector<128x128xf32> to vector<128x128xbf16>
      %c0_17 = arith.constant 0 : index
      %c0_18 = arith.constant 0 : index
      %25 = vector.load %arg7[%c0_17, %c0_18] : memref<128x128xbf16, #tpu.memory_space<vmem>>, vector<128x128xbf16>
      tpu.vector_store %arg7[%c0_17, %c0_18], %24 {strides = array<i32>} : memref<128x128xbf16, #tpu.memory_space<vmem>>, vector<128x128xbf16>,
    } else {
    }
    return
  }
  func.func @transform_0(%arg0: i32, %arg1: i32, %arg2: i32) -> (i32, i32) {
    %c0_i32 = arith.constant 0 : i32
    return %arg0, %arg2 : i32, i32
  }
  func.func @transform_1(%arg0: i32, %arg1: i32, %arg2: i32) -> (i32, i32) {
    %c0_i32 = arith.constant 0 : i32
    return %arg2, %arg1 : i32, i32
  }
  func.func @transform_2(%arg0: i32, %arg1: i32, %arg2: i32) -> (i32, i32) {
    %c0_i32 = arith.constant 0 : i32
    %c0_i32_0 = arith.constant 0 : i32
    return %c0_i32, %arg1 : i32, i32
  }
  func.func @transform_3(%arg0: i32, %arg1: i32, %arg2: i32) -> (i32, i32) {
    %c0_i32 = arith.constant 0 : i32
    %c0_i32_0 = arith.constant 0 : i32
    return %arg0, %c0_i32 : i32, i32
  }
  func.func @transform_4(%arg0: i32, %arg1: i32, %arg2: i32) -> (i32, i32) {
    %c0_i32 = arith.constant 0 : i32
    return %arg0, %arg1 : i32, i32
  }
}

</mosaic_0001>

<llo_original>
// kernel: tpu_custom_call.1
$region0: #{tpu_custom_call.1}
  #allocation0 [shape = 'u32[]', space=smem, size = 0x4, offset = 0x4, fixed_abs, tag = 'smem constant byte address 0x4 - core index']
  #allocation1 [shape = 'u32[144,128]{1,0:T(1,128)}', space=vmem, size = 0x12000, scoped, tag = 'internal scratch']
  #allocation2 [shape = 'f32[128,128]{1,0:T(8,128)}', space=vmem, size = 0x10000, scoped, tag = 'scratch operand']
  %s0 = inlined_call_operand.vmem [shape: bf16[256,256], index: 0, kind: input, shape index: {}]
  %s1 = inlined_call_operand.hbm [shape: bf16[256,256], index: 1, kind: input, shape index: {}]
  %s2 = inlined_call_operand.vmem [shape: f32[1,256], index: 2, kind: input, shape index: {}]
  %s3 = inlined_call_operand.vmem [shape: f32[256,2], index: 3, kind: input, shape index: {}]
  %s4 = inlined_call_operand.hbm [shape: bf16[256,256], index: 4, kind: output, shape index: {}]
  %s5 = sld [smem:[#allocation0]]
  $region102: #{tpu_custom_call.1} parent=0
    _
  %s7 = ssub.s32 1, %s5
  %s8 = scalar_select 0, %s7, %s5
  $region1: #{tpu_custom_call.1} parent=0
    #allocation3 [shape = 'u8[65536]{0}', space=vmem, size = 0x10000, scoped, tag = 'input window, operand 0']
    #allocation4 [shape = 'u8[65536]{0}', space=vmem, size = 0x10000, scoped, tag = 'input window, operand 1']
    #allocation5 [shape = 's32[2]{0}', space=sflag, size = 0x8, scoped, tag = 'scoped memory for tpu_custom_call.1']
    #allocation6 [shape = 's32[2]{0}', space=sflag, size = 0x8, scoped, tag = 'scoped memory for tpu_custom_call.1']
    #allocation7 [shape = 'u8[65536]{0}', space=vmem, size = 0x10000, scoped, tag = 'output window, operand 0']
    %9 = vsyncpa [#allocation5], 0
    %s10 = scalar_lea.sflag [#allocation5], 1
    %11 = vsyncpa %s10, 0
    %12 = vsyncpa [#allocation6], 0
    %s13 = scalar_lea.sflag [#allocation6], 1
    %14 = vsyncpa %s13, 0
    loop: start=0, step=1, limit=10
    $region2: #{tpu_custom_call.1} parent=1 // loop_pre_header
      _
    $region3: #{tpu_custom_call.1} parent=1 // loop_header
      %s16 = sphi 0, %s20
      %p17 = scmp.ge.s32.totalorder %s16, 10
      %s23 = sphi 0, %s42
      %s24 = sphi 0, %s38
      %s25 = sphi 0, %s34
      %s26 = sphi 0, %s23
      %s27 = sphi 0, %s24
      %s28 = sphi 0, %s25
      %s29 = sphi 0, %s26
      %s30 = sphi 0, %s27
      %s31 = sphi 0, %s28
      %s47 = sphi 0, %s49
      %s50 = sphi 0, %s47
      %s51 = sphi 0, %s50
      %s67 = sphi 0, %s51
      %s75 = sphi 0, %s77
      %s78 = sphi 0, %s75
      %s79 = sphi 0, %s78
      %s95 = sphi 0, %s79
      %s101 = sphi 0, %s103
      %s104 = sphi 0, %s101
      %s105 = sphi 0, %s104
      %s121 = sphi 0, %s105
      %s127 = sphi 0, %s129
      %s130 = sphi 0, %s127
      %s131 = sphi 0, %s130
      %s147 = sphi 0, %s131
      %s155 = sphi 0, %s157
      %s158 = sphi 0, %s155
      %s159 = sphi 0, %s158
      %s175 = sphi 0, %s159
    $region4: #{tpu_custom_call.1} parent=1 // loop_header_branch
      %19 = sbr.rel (%p17) target = $region8
    $region5: #{tpu_custom_call.1} parent=1 // loop_body
      %s21 = ssub.s32 %s16, 1
      %s22 = ssub.s32 %s16, 2
      %s32 = sadd.s32 1, %s25
      %p33 = scmp.ge.s32.totalorder %s32, 2
      %s34 = scalar_select %p33, 0, %s32
      %s35 = sadd.s32 1, %s24
      %s36 = scalar_select %p33, %s35, %s24
      %p37 = scmp.ge.s32.totalorder %s36, 2
      %s38 = scalar_select %p37, 0, %s36
      %s39 = sadd.s32 1, %s23
      %s40 = scalar_select %p37, %s39, %s23
      %p41 = scmp.ge.s32.totalorder %s40, 2
      %s42 = scalar_select %p41, 0, %s40
      %s43 = ssub.s32 %s23, %s42
      %s44 = ssub.s32 %s25, %s34
      %s45 = sor.u32 %s43, %s44
      %p46 = scmp.eq.s32.totalorder %s45, 0
      %s48 = sadd.s32 %s47, 1
      %s49 = scalar_select %p46, %s47, %s48
      %p52 = pneg %p46
      %p53 = scmp.eq.s32.totalorder %s16, 7
      %p54 = por %p52, %p53
      %p55 = scmp.ne.s32.totalorder %s47, %s50
      %p56 = scmp.eq.s32.totalorder %s16, 0
      %p57 = por %p55, %p56
      %p58 = scmp.ne.s32.totalorder %s47, %s50
      %p59 = scmp.eq.s32.totalorder %s21, 7
      %p60 = por %p58, %p59
      %p61 = scmp.ne.s32.totalorder %s50, %s51
      %p62 = scmp.eq.s32.totalorder %s21, 0
      %p63 = por %p61, %p62
      %p64 = scmp.ne.s32.totalorder %s50, %s51
      %p65 = scmp.eq.s32.totalorder %s22, 7
      %p66 = por %p64, %p65
      %p68 = scmp.ne.s32.totalorder %s51, %s67
      %p69 = scmp.eq.s32.totalorder %s22, 0
      %p70 = por %p68, %p69
      %s71 = ssub.s32 %s25, %s34
      %s72 = ssub.s32 %s24, %s38
      %s73 = sor.u32 %s71, %s72
      %p74 = scmp.eq.s32.totalorder %s73, 0
      %s76 = sadd.s32 %s75, 1
      %s77 = scalar_select %p74, %s75, %s76
      %p80 = pneg %p74
      %p81 = scmp.eq.s32.totalorder %s16, 7
      %p82 = por %p80, %p81
      %p83 = scmp.ne.s32.totalorder %s75, %s78
      %p84 = scmp.eq.s32.totalorder %s16, 0
      %p85 = por %p83, %p84
      %p86 = scmp.ne.s32.totalorder %s75, %s78
      %p87 = scmp.eq.s32.totalorder %s21, 7
      %p88 = por %p86, %p87
      %p89 = scmp.ne.s32.totalorder %s78, %s79
      %p90 = scmp.eq.s32.totalorder %s21, 0
      %p91 = por %p89, %p90
      %p92 = scmp.ne.s32.totalorder %s78, %s79
      %p93 = scmp.eq.s32.totalorder %s22, 7
      %p94 = por %p92, %p93
      %p96 = scmp.ne.s32.totalorder %s79, %s95
      %p97 = scmp.eq.s32.totalorder %s22, 0
      %p98 = por %p96, %p97
      %s99 = ssub.s32 %s24, %s38
      %p100 = scmp.eq.s32.totalorder %s99, 0
      %s102 = sadd.s32 %s101, 1
      %s103 = scalar_select %p100, %s101, %s102
      %p106 = pneg %p100
      %p107 = scmp.eq.s32.totalorder %s16, 7
      %p108 = por %p106, %p107
      %p109 = scmp.ne.s32.totalorder %s101, %s104
      %p110 = scmp.eq.s32.totalorder %s16, 0
      %p111 = por %p109, %p110
      %p112 = scmp.ne.s32.totalorder %s101, %s104
      %p113 = scmp.eq.s32.totalorder %s21, 7
      %p114 = por %p112, %p113
      %p115 = scmp.ne.s32.totalorder %s104, %s105
      %p116 = scmp.eq.s32.totalorder %s21, 0
      %p117 = por %p115, %p116
      %p118 = scmp.ne.s32.totalorder %s104, %s105
      %p119 = scmp.eq.s32.totalorder %s22, 7
      %p120 = por %p118, %p119
      %p122 = scmp.ne.s32.totalorder %s105, %s121
      %p123 = scmp.eq.s32.totalorder %s22, 0
      %p124 = por %p122, %p123
      %s125 = ssub.s32 %s23, %s42
      %p126 = scmp.eq.s32.totalorder %s125, 0
      %s128 = sadd.s32 %s127, 1
      %s129 = scalar_select %p126, %s127, %s128
      %p132 = pneg %p126
      %p133 = scmp.eq.s32.totalorder %s16, 7
      %p134 = por %p132, %p133
      %p135 = scmp.ne.s32.totalorder %s127, %s130
      %p136 = scmp.eq.s32.totalorder %s16, 0
      %p137 = por %p135, %p136
      %p138 = scmp.ne.s32.totalorder %s127, %s130
      %p139 = scmp.eq.s32.totalorder %s21, 7
      %p140 = por %p138, %p139
      %p141 = scmp.ne.s32.totalorder %s130, %s131
      %p142 = scmp.eq.s32.totalorder %s21, 0
      %p143 = por %p141, %p142
      %p144 = scmp.ne.s32.totalorder %s130, %s131
      %p145 = scmp.eq.s32.totalorder %s22, 7
      %p146 = por %p144, %p145
      %p148 = scmp.ne.s32.totalorder %s131, %s147
      %p149 = scmp.eq.s32.totalorder %s22, 0
      %p150 = por %p148, %p149
      %s151 = ssub.s32 %s23, %s42
      %s152 = ssub.s32 %s24, %s38
      %s153 = sor.u32 %s151, %s152
      %p154 = scmp.eq.s32.totalorder %s153, 0
      %s156 = sadd.s32 %s155, 1
      %s157 = scalar_select %p154, %s155, %s156
      %p160 = pneg %p154
      %p161 = scmp.eq.s32.totalorder %s16, 7
      %p162 = por %p160, %p161
      %p163 = scmp.ne.s32.totalorder %s155, %s158
      %p164 = scmp.eq.s32.totalorder %s16, 0
      %p165 = por %p163, %p164
      %p166 = scmp.ne.s32.totalorder %s155, %s158
      %p167 = scmp.eq.s32.totalorder %s21, 7
      %p168 = por %p166, %p167
      %p169 = scmp.ne.s32.totalorder %s158, %s159
      %p170 = scmp.eq.s32.totalorder %s21, 0
      %p171 = por %p169, %p170
      %p172 = scmp.ne.s32.totalorder %s158, %s159
      %p173 = scmp.eq.s32.totalorder %s22, 7
      %p174 = por %p172, %p173
      %p176 = scmp.ne.s32.totalorder %s159, %s175
      %p177 = scmp.eq.s32.totalorder %s22, 0
      %p178 = por %p176, %p177
      %p179 = scmp.le.s32.totalorder 1, %s16
      %p180 = scmp.lt.s32.totalorder %s16, 9
      %p181 = pnand %p179, %p180
      %p182 = pneg %p181
      // Predicated region
      $region9: #{tpu_custom_call.1} parent=5 // pred_check
        _
      $region10: #{tpu_custom_call.1} parent=5 // pred_check_branch
        %184 = sbr.rel (%p181) target = $region12
      $region11: #{tpu_custom_call.1} parent=5 // pred_region
        %s185 = ssub.s32 %s16, 1
      $region12: #{tpu_custom_call.1} parent=5 // pred_fallthru
        _
      %p186 = scmp.lt.s32.totalorder %s16, 8
      // Predicated region
      $region13: #{tpu_custom_call.1} parent=5 // pred_check
        %p187 = pneg %p186
      $region14: #{tpu_custom_call.1} parent=5 // pred_check_branch
        %189 = sbr.rel (%p187) target = $region16
      $region15: #{tpu_custom_call.1} parent=5 // pred_region
        // Predicated region
        $region17: #{tpu_custom_call.1} parent=15 // pred_check
          %p190 = pneg %p57
        $region18: #{tpu_custom_call.1} parent=15 // pred_check_branch
          %192 = sbr.rel (%p190) target = $region20
        $region19: #{tpu_custom_call.1} parent=15 // pred_region
          %s193 = sand.u32 %s47, 1
          %s194 = sand.u32 %s47, 1
          %s195 = smul.addr %s194, 64
          %s196 = scalar_lea.vmem [#allocation3], %s195
          %s197 = smul.u32 16, %s23
          %s198 = smul.addr %s197, 2
          %s199 = sadd.s32 %s25, %s198
          %s200 = smul.addr %s199, 4
          %s201 = scalar_lea.vmem %s0, %s200
          // Predicated region
          $region21: #{tpu_custom_call.1} parent=19 // pred_check
            _
          $region22: #{tpu_custom_call.1} parent=19 // pred_check_branch
            %203 = sbr.rel (0) target = $region24
          $region23: #{tpu_custom_call.1} parent=19 // pred_region
            // Predicated region
            $region25: #{tpu_custom_call.1} parent=23 // pred_check
              _
            $region26: #{tpu_custom_call.1} parent=23 // pred_check_branch
              %205 = sbr.rel target = $region28
            $region27: #{tpu_custom_call.1} parent=23 // pred_region
              // Predicated region
              $region40: #{tpu_custom_call.1} parent=27 // pred_check
                _
              $region41: #{tpu_custom_call.1} parent=27 // pred_check_branch
                %250 = sbr.rel (0) target = $region43
              $region42: #{tpu_custom_call.1} parent=27 // pred_region
                loop: start=0, step=1, limit=1
                $region44: #{tpu_custom_call.1} parent=42 // loop_pre_header
                  _
                $region45: #{tpu_custom_call.1} parent=42 // loop_header
                  %s252 = sphi 0, %s256
                  %p253 = scmp.ge.s32.totalorder %s252, 1
                  %s257 = sphi %s201, %s201
                  %s258 = sphi %s196, %s196
                $region46: #{tpu_custom_call.1} parent=42 // loop_header_branch
                  %255 = sbr.rel (%p253) target = $region50
                $region47: #{tpu_custom_call.1} parent=42 // loop_body
                  _
                $region48: #{tpu_custom_call.1} parent=42 // loop_footer
                  %s256 = sadd.s32 1, %s252
                $region49: #{tpu_custom_call.1} parent=42 // loop_footer_branch
                  %251 = sbr.rel target = $region45
                $region50: #{tpu_custom_call.1} parent=42 // loop_exit
                  _
                loop: start=0, step=1, limit=1
                $region51: #{tpu_custom_call.1} parent=42 // loop_pre_header
                  _
                $region52: #{tpu_custom_call.1} parent=42 // loop_header
                  %s261 = sphi 0, %s265
                  %p262 = scmp.ge.s32.totalorder %s261, 1
                  %s266 = sphi %s201, %s201
                  %s267 = sphi %s196, %s196
                $region53: #{tpu_custom_call.1} parent=42 // loop_header_branch
                  %264 = sbr.rel (%p262) target = $region57
                $region54: #{tpu_custom_call.1} parent=42 // loop_body
                  %v268 = vld [vmem:[%s266] sm:$0xf]
                  %269 = vst [vmem:[%s267] sm:$0xf] %v268
                  %v270 = vld [vmem:[%s266 + $0x8] sm:$0xf]
                  %271 = vst [vmem:[%s267 + $0x4] sm:$0xf] %v270
                  %v272 = vld [vmem:[%s266 + $0x10] sm:$0xf]
                  %273 = vst [vmem:[%s267 + $0x8] sm:$0xf] %v272
                  %v274 = vld [vmem:[%s266 + $0x18] sm:$0xf]
                  %275 = vst [vmem:[%s267 + $0xc] sm:$0xf] %v274
                  %v276 = vld [vmem:[%s266 + $0x20] sm:$0xf]
                  %277 = vst [vmem:[%s267 + $0x10] sm:$0xf] %v276
                  %v278 = vld [vmem:[%s266 + $0x28] sm:$0xf]
                  %279 = vst [vmem:[%s267 + $0x14] sm:$0xf] %v278
                  %v280 = vld [vmem:[%s266 + $0x30] sm:$0xf]
                  %281 = vst [vmem:[%s267 + $0x18] sm:$0xf] %v280
                  %v282 = vld [vmem:[%s266 + $0x38] sm:$0xf]
                  %283 = vst [vmem:[%s267 + $0x1c] sm:$0xf] %v282
                  %v284 = vld [vmem:[%s266 + $0x40] sm:$0xf]
                  %285 = vst [vmem:[%s267 + $0x20] sm:$0xf] %v284
                  %v286 = vld [vmem:[%s266 + $0x48] sm:$0xf]
                  %287 = vst [vmem:[%s267 + $0x24] sm:$0xf] %v286
                  %v288 = vld [vmem:[%s266 + $0x50] sm:$0xf]
                  %289 = vst [vmem:[%s267 + $0x28] sm:$0xf] %v288
                  %v290 = vld [vmem:[%s266 + $0x58] sm:$0xf]
                  %291 = vst [vmem:[%s267 + $0x2c] sm:$0xf] %v290
                  %v292 = vld [vmem:[%s266 + $0x60] sm:$0xf]
                  %293 = vst [vmem:[%s267 + $0x30] sm:$0xf] %v292
                  %v294 = vld [vmem:[%s266 + $0x68] sm:$0xf]
                  %295 = vst [vmem:[%s267 + $0x34] sm:$0xf] %v294
                  %v296 = vld [vmem:[%s266 + $0x70] sm:$0xf]
                  %297 = vst [vmem:[%s267 + $0x38] sm:$0xf] %v296
                  %v298 = vld [vmem:[%s266 + $0x78] sm:$0xf]
                  %299 = vst [vmem:[%s267 + $0x3c] sm:$0xf] %v298
                $region55: #{tpu_custom_call.1} parent=42 // loop_footer
                  %s265 = sadd.s32 1, %s261
                $region56: #{tpu_custom_call.1} parent=42 // loop_footer_branch
                  %260 = sbr.rel target = $region52
                $region57: #{tpu_custom_call.1} parent=42 // loop_exit
                  _
              $region43: #{tpu_custom_call.1} parent=27 // pred_fallthru
                _
            $region28: #{tpu_custom_call.1} parent=23 // pred_fallthru
              _
            // Predicated region
            $region29: #{tpu_custom_call.1} parent=23 // pred_check
              _
            $region30: #{tpu_custom_call.1} parent=23 // pred_check_branch
              %207 = sbr.rel (0) target = $region32
            $region31: #{tpu_custom_call.1} parent=23 // pred_region
              loop: start=0, step=1, limit=1
              $region33: #{tpu_custom_call.1} parent=31 // loop_pre_header
                _
              $region34: #{tpu_custom_call.1} parent=31 // loop_header
                %s210 = sphi 0, %s214
                %p211 = scmp.ge.s32.totalorder %s210, 1
                %s215 = sphi %s201, %s201
                %s216 = sphi %s196, %s196
              $region35: #{tpu_custom_call.1} parent=31 // loop_header_branch
                %213 = sbr.rel (%p211) target = $region39
              $region36: #{tpu_custom_call.1} parent=31 // loop_body
                %v217 = vld [vmem:[%s215] sm:$0xf]
                %218 = vst [vmem:[%s216] sm:$0xf] %v217
                %v219 = vld [vmem:[%s215 + $0x8] sm:$0xf]
                %220 = vst [vmem:[%s216 + $0x4] sm:$0xf] %v219
                %v221 = vld [vmem:[%s215 + $0x10] sm:$0xf]
                %222 = vst [vmem:[%s216 + $0x8] sm:$0xf] %v221
                %v223 = vld [vmem:[%s215 + $0x18] sm:$0xf]
                %224 = vst [vmem:[%s216 + $0xc] sm:$0xf] %v223
                %v225 = vld [vmem:[%s215 + $0x20] sm:$0xf]
                %226 = vst [vmem:[%s216 + $0x10] sm:$0xf] %v225
                %v227 = vld [vmem:[%s215 + $0x28] sm:$0xf]
                %228 = vst [vmem:[%s216 + $0x14] sm:$0xf] %v227
                %v229 = vld [vmem:[%s215 + $0x30] sm:$0xf]
                %230 = vst [vmem:[%s216 + $0x18] sm:$0xf] %v229
                %v231 = vld [vmem:[%s215 + $0x38] sm:$0xf]
                %232 = vst [vmem:[%s216 + $0x1c] sm:$0xf] %v231
                %v233 = vld [vmem:[%s215 + $0x40] sm:$0xf]
                %234 = vst [vmem:[%s216 + $0x20] sm:$0xf] %v233
                %v235 = vld [vmem:[%s215 + $0x48] sm:$0xf]
                %236 = vst [vmem:[%s216 + $0x24] sm:$0xf] %v235
                %v237 = vld [vmem:[%s215 + $0x50] sm:$0xf]
                %238 = vst [vmem:[%s216 + $0x28] sm:$0xf] %v237
                %v239 = vld [vmem:[%s215 + $0x58] sm:$0xf]
                %240 = vst [vmem:[%s216 + $0x2c] sm:$0xf] %v239
                %v241 = vld [vmem:[%s215 + $0x60] sm:$0xf]
                %242 = vst [vmem:[%s216 + $0x30] sm:$0xf] %v241
                %v243 = vld [vmem:[%s215 + $0x68] sm:$0xf]
                %244 = vst [vmem:[%s216 + $0x34] sm:$0xf] %v243
                %v245 = vld [vmem:[%s215 + $0x70] sm:$0xf]
                %246 = vst [vmem:[%s216 + $0x38] sm:$0xf] %v245
                %v247 = vld [vmem:[%s215 + $0x78] sm:$0xf]
                %248 = vst [vmem:[%s216 + $0x3c] sm:$0xf] %v247
              $region37: #{tpu_custom_call.1} parent=31 // loop_footer
                %s214 = sadd.s32 1, %s210
              $region38: #{tpu_custom_call.1} parent=31 // loop_footer_branch
                %209 = sbr.rel target = $region34
              $region39: #{tpu_custom_call.1} parent=31 // loop_exit
                _
            $region32: #{tpu_custom_call.1} parent=23 // pred_fallthru
              _
          $region24: #{tpu_custom_call.1} parent=19 // pred_fallthru
            _
          %300 = vnop
        $region20: #{tpu_custom_call.1} parent=15 // pred_fallthru
          _
        // Predicated region
        $region58: #{tpu_custom_call.1} parent=15 // pred_check
          %p301 = pneg %p85
        $region59: #{tpu_custom_call.1} parent=15 // pred_check_branch
          %303 = sbr.rel (%p301) target = $region61
        $region60: #{tpu_custom_call.1} parent=15 // pred_region
          %s304 = sand.u32 %s75, 1
          %s305 = scalar_lea.sflag [#allocation5], %s304
          %s306 = sand.u32 %s75, 1
          %s307 = smul.addr %s306, 64
          %s308 = scalar_lea.vmem [#allocation4], %s307
          %s309 = smul.u32 16, %s25
          %s311 = ssub.s32 1024, 1024
          %312 = vsyncadd %s305, %s311
          %s313 = smul.addr %s309, 2
          %s314 = sadd.s32 %s24, %s313
          %s315 = smul.addr %s314, 64
          %s316 = scalar_lea.hbm %s1, %s315
          %s317 = sshll.u32 %s308, 4
          %s318 = int_to_ptr.vmem [resolvable:$true] %s317
          %323 = dma.hbm_to_vmem [thread:$0]  %s316, 1024, %s318, %s305, 128, 64, 4
        $region61: #{tpu_custom_call.1} parent=15 // pred_fallthru
          _
        // Predicated region
        $region62: #{tpu_custom_call.1} parent=15 // pred_check
          %p324 = pneg %p111
        $region63: #{tpu_custom_call.1} parent=15 // pred_check_branch
          %326 = sbr.rel (%p324) target = $region65
        $region64: #{tpu_custom_call.1} parent=15 // pred_region
          %p327 = scmp.lt.s32.totalorder %s24, 1
          %s328 = scalar_select %p327, %s24, 1
          %s329 = scalar_lea.vmem %s2, %s328
        $region65: #{tpu_custom_call.1} parent=15 // pred_fallthru
          _
        // Predicated region
        $region66: #{tpu_custom_call.1} parent=15 // pred_check
          %p330 = pneg %p137
        $region67: #{tpu_custom_call.1} parent=15 // pred_check_branch
          %332 = sbr.rel (%p330) target = $region69
        $region68: #{tpu_custom_call.1} parent=15 // pred_region
          %s333 = smul.u32 16, %s23
          %p334 = scmp.lt.s32.totalorder %s333, 31
          %s335 = scalar_select %p334, %s333, 31
          %s336 = smul.addr %s335, 8
          %s337 = scalar_lea.vmem %s3, %s336
          %s338 = smul.u32 16, %s23
        $region69: #{tpu_custom_call.1} parent=15 // pred_fallthru
          _
      $region16: #{tpu_custom_call.1} parent=5 // pred_fallthru
        _
      %p339 = scmp.le.s32.totalorder 1, %s16
      %p340 = scmp.lt.s32.totalorder %s16, 9
      %p341 = pnand %p339, %p340
      %p342 = pneg %p341
      // Predicated region
      $region70: #{tpu_custom_call.1} parent=5 // pred_check
        _
      $region71: #{tpu_custom_call.1} parent=5 // pred_check_branch
        %344 = sbr.rel (%p341) target = $region73
      $region72: #{tpu_custom_call.1} parent=5 // pred_region
        %s345 = ssub.s32 %s16, 1
        %s346 = sand.u32 %s50, 1
        %s347 = sand.u32 %s50, 1
        %s348 = smul.addr %s347, 64
        %s349 = scalar_lea.vmem [#allocation3], %s348
        // Predicated region
        $region74: #{tpu_custom_call.1} parent=72 // pred_check
          %p350 = pneg %p63
        $region75: #{tpu_custom_call.1} parent=72 // pred_check_branch
          %352 = sbr.rel (%p350) target = $region77
        $region76: #{tpu_custom_call.1} parent=72 // pred_region
          _
        $region77: #{tpu_custom_call.1} parent=72 // pred_fallthru
          _
        %s353 = sand.u32 %s78, 1
        %s354 = scalar_lea.sflag [#allocation5], %s353
        %s355 = sand.u32 %s78, 1
        %s356 = smul.addr %s355, 64
        %s357 = scalar_lea.vmem [#allocation4], %s356
        // Predicated region
        $region78: #{tpu_custom_call.1} parent=72 // pred_check
          %p358 = pneg %p91
        $region79: #{tpu_custom_call.1} parent=72 // pred_check_branch
          %360 = sbr.rel (%p358) target = $region81
        $region80: #{tpu_custom_call.1} parent=72 // pred_region
          %361 = dma.done %s354, 1024
        $region81: #{tpu_custom_call.1} parent=72 // pred_fallthru
          _
        %s362 = sand.u32 %s50, 1
        %s363 = sand.u32 %s50, 1
        %s364 = smul.addr %s363, 64
        %s365 = scalar_lea.vmem [#allocation3], %s364
        %p366 = pneg %p63
        %p367 = pneg %p60
        %s368 = sand.u32 %s78, 1
        %s369 = scalar_lea.sflag [#allocation5], %s368
        %s370 = sand.u32 %s78, 1
        %s371 = smul.addr %s370, 64
        %s372 = scalar_lea.vmem [#allocation4], %s371
        %p373 = pneg %p91
        %p374 = pneg %p88
        %p375 = scmp.lt.s32.totalorder %s27, 1
        %s376 = scalar_select %p375, %s27, 1
        %s377 = scalar_lea.vmem %s2, %s376
        %p378 = pneg %p117
        %p379 = pneg %p114
        %s380 = smul.u32 16, %s26
        %p381 = scmp.lt.s32.totalorder %s380, 31
        %s382 = scalar_select %p381, %s380, 31
        %s383 = smul.addr %s382, 8
        %s384 = scalar_lea.vmem %s3, %s383
        %p385 = pneg %p143
        %p386 = pneg %p140
        %p387 = pneg %p171
        %p388 = pneg %p168
        %s389 = sand.u32 %s158, 1
        %s390 = scalar_lea.sflag [#allocation6], %s389
        %s391 = sand.u32 %s158, 1
        %s392 = smul.addr %s391, 64
        %s393 = scalar_lea.vmem [#allocation7], %s392
        %s394 = smul.u32 16, %s26
        %s395 = smul.u32 16, %s28
        %p396 = scmp.lt.s32.totalorder %s27, 1
        %s397 = scalar_select %p396, %s27, 1
        %s398 = scalar_lea.vmem %s2, %s397
        %s399 = smul.u32 16, %s26
        %p400 = scmp.lt.s32.totalorder %s399, 31
        %s401 = scalar_select %p400, %s399, 31
        %s402 = smul.addr %s401, 8
        %s403 = scalar_lea.vmem %s3, %s402
        %s404 = smul.u32 16, %s26
        %s405 = smul.u32 16, %s26
        %p407 = scmp.eq.s32.totalorder %s28, 0
        // Predicated region
        $region82: #{tpu_custom_call.1} parent=72 // pred_check
          %p408 = pneg %p407
        $region83: #{tpu_custom_call.1} parent=72 // pred_check_branch
          %410 = sbr.rel (%p408) target = $region85
        $region84: #{tpu_custom_call.1} parent=72 // pred_region
          %411 = vst [vmem:[#allocation2] sm:$0xff] 0.0
          %412 = vst [vmem:[#allocation2 + $0x8] sm:$0xff] 0.0
          %413 = vst [vmem:[#allocation2 + $0x10] sm:$0xff] 0.0
          %414 = vst [vmem:[#allocation2 + $0x18] sm:$0xff] 0.0
          %415 = vst [vmem:[#allocation2 + $0x20] sm:$0xff] 0.0
          %416 = vst [vmem:[#allocation2 + $0x28] sm:$0xff] 0.0
          %417 = vst [vmem:[#allocation2 + $0x30] sm:$0xff] 0.0
          %418 = vst [vmem:[#allocation2 + $0x38] sm:$0xff] 0.0
          %419 = vst [vmem:[#allocation2 + $0x40] sm:$0xff] 0.0
          %420 = vst [vmem:[#allocation2 + $0x48] sm:$0xff] 0.0
          %421 = vst [vmem:[#allocation2 + $0x50] sm:$0xff] 0.0
          %422 = vst [vmem:[#allocation2 + $0x58] sm:$0xff] 0.0
          %423 = vst [vmem:[#allocation2 + $0x60] sm:$0xff] 0.0
          %424 = vst [vmem:[#allocation2 + $0x68] sm:$0xff] 0.0
          %425 = vst [vmem:[#allocation2 + $0x70] sm:$0xff] 0.0
          %426 = vst [vmem:[#allocation2 + $0x78] sm:$0xff] 0.0
        $region85: #{tpu_custom_call.1} parent=72 // pred_fallthru
          _
        %v427 = vld [vmem:[#allocation2] sm:$0xff]
        %v428 = vld [vmem:[#allocation2 + $0x8] sm:$0xff]
        %v429 = vld [vmem:[#allocation2 + $0x10] sm:$0xff]
        %v430 = vld [vmem:[#allocation2 + $0x18] sm:$0xff]
        %v431 = vld [vmem:[#allocation2 + $0x20] sm:$0xff]
        %v432 = vld [vmem:[#allocation2 + $0x28] sm:$0xff]
        %v433 = vld [vmem:[#allocation2 + $0x30] sm:$0xff]
        %v434 = vld [vmem:[#allocation2 + $0x38] sm:$0xff]
        %v435 = vld [vmem:[#allocation2 + $0x40] sm:$0xff]
        %v436 = vld [vmem:[#allocation2 + $0x48] sm:$0xff]
        %v437 = vld [vmem:[#allocation2 + $0x50] sm:$0xff]
        %v438 = vld [vmem:[#allocation2 + $0x58] sm:$0xff]
        %v439 = vld [vmem:[#allocation2 + $0x60] sm:$0xff]
        %v440 = vld [vmem:[#allocation2 + $0x68] sm:$0xff]
        %v441 = vld [vmem:[#allocation2 + $0x70] sm:$0xff]
        %v442 = vld [vmem:[#allocation2 + $0x78] sm:$0xff]
        %v443 = vld [vmem:[%s349] sm:$0xf]
        %v444 = vld [vmem:[%s349 + $0x4] sm:$0xf]
        %v445 = vld [vmem:[%s349 + $0x8] sm:$0xf]
        %v446 = vld [vmem:[%s349 + $0xc] sm:$0xf]
        %v447 = vld [vmem:[%s349 + $0x10] sm:$0xf]
        %v448 = vld [vmem:[%s349 + $0x14] sm:$0xf]
        %v449 = vld [vmem:[%s349 + $0x18] sm:$0xf]
        %v450 = vld [vmem:[%s349 + $0x1c] sm:$0xf]
        %v451 = vld [vmem:[%s349 + $0x20] sm:$0xf]
        %v452 = vld [vmem:[%s349 + $0x24] sm:$0xf]
        %v453 = vld [vmem:[%s349 + $0x28] sm:$0xf]
        %v454 = vld [vmem:[%s349 + $0x2c] sm:$0xf]
        %v455 = vld [vmem:[%s349 + $0x30] sm:$0xf]
        %v456 = vld [vmem:[%s349 + $0x34] sm:$0xf]
        %v457 = vld [vmem:[%s349 + $0x38] sm:$0xf]
        %v458 = vld [vmem:[%s349 + $0x3c] sm:$0xf]
        %v459 = vld [vmem:[%s357] sm:$0xf]
        %v460 = vld [vmem:[%s357 + $0x4] sm:$0xf]
        %v461 = vld [vmem:[%s357 + $0x8] sm:$0xf]
        %v462 = vld [vmem:[%s357 + $0xc] sm:$0xf]
        %v463 = vld [vmem:[%s357 + $0x10] sm:$0xf]
        %v464 = vld [vmem:[%s357 + $0x14] sm:$0xf]
        %v465 = vld [vmem:[%s357 + $0x18] sm:$0xf]
        %v466 = vld [vmem:[%s357 + $0x1c] sm:$0xf]
        %v467 = vld [vmem:[%s357 + $0x20] sm:$0xf]
        %v468 = vld [vmem:[%s357 + $0x24] sm:$0xf]
        %v469 = vld [vmem:[%s357 + $0x28] sm:$0xf]
        %v470 = vld [vmem:[%s357 + $0x2c] sm:$0xf]
        %v471 = vld [vmem:[%s357 + $0x30] sm:$0xf]
        %v472 = vld [vmem:[%s357 + $0x34] sm:$0xf]
        %v473 = vld [vmem:[%s357 + $0x38] sm:$0xf]
        %v474 = vld [vmem:[%s357 + $0x3c] sm:$0xf]
        %v491 = vunpack.c.l.b16 %v443
        %v492 = vunpack.c.l.b16 %v444
        %v493 = vunpack.c.l.b16 %v445
        %v494 = vunpack.c.l.b16 %v446
        %v495 = vunpack.c.l.b16 %v447
        %v496 = vunpack.c.l.b16 %v448
        %v497 = vunpack.c.l.b16 %v449
        %v498 = vunpack.c.l.b16 %v450
        %v499 = vunpack.c.l.b16 %v451
        %v500 = vunpack.c.l.b16 %v452
        %v501 = vunpack.c.l.b16 %v453
        %v502 = vunpack.c.l.b16 %v454
        %v503 = vunpack.c.l.b16 %v455
        %v504 = vunpack.c.l.b16 %v456
        %v505 = vunpack.c.l.b16 %v457
        %v506 = vunpack.c.l.b16 %v458
        %v507 = vpack.c.b16 %v492, %v491
        %v508 = vpack.c.b16 %v494, %v493
        %v509 = vpack.c.b16 %v496, %v495
        %v510 = vpack.c.b16 %v498, %v497
        %v511 = vpack.c.b16 %v500, %v499
        %v512 = vpack.c.b16 %v502, %v501
        %v513 = vpack.c.b16 %v504, %v503
        %v514 = vpack.c.b16 %v506, %v505
        %v539 = vunpack.c.l.b16 %v459
        %v540 = vunpack.c.l.b16 %v460
        %v541 = vunpack.c.l.b16 %v461
        %v542 = vunpack.c.l.b16 %v462
        %v543 = vunpack.c.l.b16 %v463
        %v544 = vunpack.c.l.b16 %v464
        %v545 = vunpack.c.l.b16 %v465
        %v546 = vunpack.c.l.b16 %v466
        %v547 = vunpack.c.l.b16 %v467
        %v548 = vunpack.c.l.b16 %v468
        %v549 = vunpack.c.l.b16 %v469
        %v550 = vunpack.c.l.b16 %v470
        %v551 = vunpack.c.l.b16 %v471
        %v552 = vunpack.c.l.b16 %v472
        %v553 = vunpack.c.l.b16 %v473
        %v554 = vunpack.c.l.b16 %v474
        %v555 = vpack.c.b16 %v540, %v539
        %v556 = vpack.c.b16 %v542, %v541
        %v557 = vpack.c.b16 %v544, %v543
        %v558 = vpack.c.b16 %v546, %v545
        %v559 = vpack.c.b16 %v548, %v547
        %v560 = vpack.c.b16 %v550, %v549
        %v561 = vpack.c.b16 %v552, %v551
        %v562 = vpack.c.b16 %v554, %v553
        %571 = vmatprep.subr.bf16.mxu0 0
        %572 = vmatpush1.bf16.msra.mxu0 %v555
        %573 = vmatprep.subr.bf16.mxu0 0
        %574 = vmatpush1.bf16.msra.mxu0 %v556
        %575 = vmatprep.subr.bf16.mxu0 0
        %576 = vmatpush1.bf16.msra.mxu0 %v557
        %577 = vmatprep.subr.bf16.mxu0 0
        %578 = vmatpush1.bf16.msra.mxu0 %v558
        %579 = vmatprep.subr.bf16.mxu0 0
        %580 = vmatpush1.bf16.msra.mxu0 %v559
        %581 = vmatprep.subr.bf16.mxu0 0
        %582 = vmatpush1.bf16.msra.mxu0 %v560
        %583 = vmatprep.subr.bf16.mxu0 0
        %584 = vmatpush1.bf16.msra.mxu0 %v561
        %585 = vmatprep.subr.bf16.mxu0 0
        %586 = vmatpush1.bf16.msra.mxu0 %v562
        %587 = vmatprep.subr.bf16.mxu0 0
        %588 = vmatpush1.bf16.msra.mxu0 0
        %589 = vmatprep.subr.bf16.mxu0 0
        %590 = vmatpush1.bf16.msra.mxu0 0
        %591 = vmatprep.subr.bf16.mxu0 0
        %592 = vmatpush1.bf16.msra.mxu0 0
        %593 = vmatprep.subr.bf16.mxu0 0
        %594 = vmatpush1.bf16.msra.mxu0 0
        %595 = vmatprep.subr.bf16.mxu0 0
        %596 = vmatpush1.bf16.msra.mxu0 0
        %597 = vmatprep.subr.bf16.mxu0 0
        %598 = vmatpush1.bf16.msra.mxu0 0
        %599 = vmatprep.subr.bf16.mxu0 0
        %600 = vmatpush1.bf16.msra.mxu0 0
        %601 = vmatprep.subr.bf16.mxu0 0
        %602 = vmatpush1.bf16.msra.mxu0 0
        %603 = vmatprep.mubr.bf16.mxu0 0
        %604 = vmatmul.mubr.bf16.gmra.mrb[0].mxu0 %v507
        %v605 = vpop.f32.mrb[0].mxu0
        %v606 = vadd.f32 0.0, %v605
        %v607 = vpop.f32.mrb[0].mxu0
        %v608 = vpop.f32.mrb[0].mxu0
        %v609 = vadd.f32 0.0, %v608
        %v610 = vpop.f32.mrb[0].mxu0
        %611 = vmatprep.mubr.bf16.mxu0 0
        %612 = vmatmul.mubr.bf16.gmra.mrb[0].mxu0 %v508
        %v613 = vpop.f32.mrb[0].mxu0
        %v614 = vadd.f32 0.0, %v613
        %v615 = vpop.f32.mrb[0].mxu0
        %v616 = vpop.f32.mrb[0].mxu0
        %v617 = vadd.f32 0.0, %v616
        %v618 = vpop.f32.mrb[0].mxu0
        %619 = vmatprep.mubr.bf16.mxu0 0
        %620 = vmatmul.mubr.bf16.gmra.mrb[0].mxu0 %v509
        %v621 = vpop.f32.mrb[0].mxu0
        %v622 = vadd.f32 0.0, %v621
        %v623 = vpop.f32.mrb[0].mxu0
        %v624 = vpop.f32.mrb[0].mxu0
        %v625 = vadd.f32 0.0, %v624
        %v626 = vpop.f32.mrb[0].mxu0
        %627 = vmatprep.mubr.bf16.mxu0 0
        %628 = vmatmul.mubr.bf16.gmra.mrb[0].mxu0 %v510
        %v629 = vpop.f32.mrb[0].mxu0
        %v630 = vadd.f32 0.0, %v629
        %v631 = vpop.f32.mrb[0].mxu0
        %v632 = vpop.f32.mrb[0].mxu0
        %v633 = vadd.f32 0.0, %v632
        %v634 = vpop.f32.mrb[0].mxu0
        %635 = vmatprep.mubr.bf16.mxu0 0
        %636 = vmatmul.mubr.bf16.gmra.mrb[0].mxu0 %v511
        %v637 = vpop.f32.mrb[0].mxu0
        %v638 = vadd.f32 0.0, %v637
        %v639 = vpop.f32.mrb[0].mxu0
        %v640 = vpop.f32.mrb[0].mxu0
        %v641 = vadd.f32 0.0, %v640
        %v642 = vpop.f32.mrb[0].mxu0
        %643 = vmatprep.mubr.bf16.mxu0 0
        %644 = vmatmul.mubr.bf16.gmra.mrb[0].mxu0 %v512
        %v645 = vpop.f32.mrb[0].mxu0
        %v646 = vadd.f32 0.0, %v645
        %v647 = vpop.f32.mrb[0].mxu0
        %v648 = vpop.f32.mrb[0].mxu0
        %v649 = vadd.f32 0.0, %v648
        %v650 = vpop.f32.mrb[0].mxu0
        %651 = vmatprep.mubr.bf16.mxu0 0
        %652 = vmatmul.mubr.bf16.gmra.mrb[0].mxu0 %v513
        %v653 = vpop.f32.mrb[0].mxu0
        %v654 = vadd.f32 0.0, %v653
        %v655 = vpop.f32.mrb[0].mxu0
        %v656 = vpop.f32.mrb[0].mxu0
        %v657 = vadd.f32 0.0, %v656
        %v658 = vpop.f32.mrb[0].mxu0
        %659 = vmatprep.mubr.bf16.mxu0 0
        %660 = vmatmul.mubr.bf16.gmra.mrb[0].mxu0 %v514
        %v661 = vpop.f32.mrb[0].mxu0
        %v662 = vadd.f32 0.0, %v661
        %v663 = vpop.f32.mrb[0].mxu0
        %v664 = vpop.f32.mrb[0].mxu0
        %v665 = vadd.f32 0.0, %v664
        %v666 = vpop.f32.mrb[0].mxu0
        %667 = vdwg.mxu0
        %v668 = vadd.f32 %v427, %v606
        %v669 = vadd.f32 %v428, %v609
        %v670 = vadd.f32 %v429, %v614
        %v671 = vadd.f32 %v430, %v617
        %v672 = vadd.f32 %v431, %v622
        %v673 = vadd.f32 %v432, %v625
        %v674 = vadd.f32 %v433, %v630
        %v675 = vadd.f32 %v434, %v633
        %v676 = vadd.f32 %v435, %v638
        %v677 = vadd.f32 %v436, %v641
        %v678 = vadd.f32 %v437, %v646
        %v679 = vadd.f32 %v438, %v649
        %v680 = vadd.f32 %v439, %v654
        %v681 = vadd.f32 %v440, %v657
        %v682 = vadd.f32 %v441, %v662
        %v683 = vadd.f32 %v442, %v665
        %684 = vst [vmem:[#allocation2] sm:$0xff] %v668
        %685 = vst [vmem:[#allocation2 + $0x8] sm:$0xff] %v669
        %686 = vst [vmem:[#allocation2 + $0x10] sm:$0xff] %v670
        %687 = vst [vmem:[#allocation2 + $0x18] sm:$0xff] %v671
        %688 = vst [vmem:[#allocation2 + $0x20] sm:$0xff] %v672
        %689 = vst [vmem:[#allocation2 + $0x28] sm:$0xff] %v673
        %690 = vst [vmem:[#allocation2 + $0x30] sm:$0xff] %v674
        %691 = vst [vmem:[#allocation2 + $0x38] sm:$0xff] %v675
        %692 = vst [vmem:[#allocation2 + $0x40] sm:$0xff] %v676
        %693 = vst [vmem:[#allocation2 + $0x48] sm:$0xff] %v677
        %694 = vst [vmem:[#allocation2 + $0x50] sm:$0xff] %v678
        %695 = vst [vmem:[#allocation2 + $0x58] sm:$0xff] %v679
        %696 = vst [vmem:[#allocation2 + $0x60] sm:$0xff] %v680
        %697 = vst [vmem:[#allocation2 + $0x68] sm:$0xff] %v681
        %698 = vst [vmem:[#allocation2 + $0x70] sm:$0xff] %v682
        %699 = vst [vmem:[#allocation2 + $0x78] sm:$0xff] %v683
        %p700 = scmp.eq.s32.totalorder %s28, 1
        // Predicated region
        $region86: #{tpu_custom_call.1} parent=72 // pred_check
          %p701 = pneg %p700
        $region87: #{tpu_custom_call.1} parent=72 // pred_check_branch
          %703 = sbr.rel (%p701) target = $region89
        $region88: #{tpu_custom_call.1} parent=72 // pred_region
          %v704 = vld [vmem:[%s403] sm:$0xff]
          %v705 = vld [vmem:[%s403 + $0x8] sm:$0xff]
          %v706 = vld [vmem:[%s403 + $0x10] sm:$0xff]
          %v707 = vld [vmem:[%s403 + $0x18] sm:$0xff]
          %v708 = vld [vmem:[%s403 + $0x20] sm:$0xff]
          %v709 = vld [vmem:[%s403 + $0x28] sm:$0xff]
          %v710 = vld [vmem:[%s403 + $0x30] sm:$0xff]
          %v711 = vld [vmem:[%s403 + $0x38] sm:$0xff]
          %v712 = vld [vmem:[%s403 + $0x40] sm:$0xff]
          %v713 = vld [vmem:[%s403 + $0x48] sm:$0xff]
          %v714 = vld [vmem:[%s403 + $0x50] sm:$0xff]
          %v715 = vld [vmem:[%s403 + $0x58] sm:$0xff]
          %v716 = vld [vmem:[%s403 + $0x60] sm:$0xff]
          %v717 = vld [vmem:[%s403 + $0x68] sm:$0xff]
          %v718 = vld [vmem:[%s403 + $0x70] sm:$0xff]
          %v719 = vld [vmem:[%s403 + $0x78] sm:$0xff]
          %v720 = vld [vmem:[#allocation2] sm:$0xff]
          %v721 = vld [vmem:[#allocation2 + $0x8] sm:$0xff]
          %v722 = vld [vmem:[#allocation2 + $0x10] sm:$0xff]
          %v723 = vld [vmem:[#allocation2 + $0x18] sm:$0xff]
          %v724 = vld [vmem:[#allocation2 + $0x20] sm:$0xff]
          %v725 = vld [vmem:[#allocation2 + $0x28] sm:$0xff]
          %v726 = vld [vmem:[#allocation2 + $0x30] sm:$0xff]
          %v727 = vld [vmem:[#allocation2 + $0x38] sm:$0xff]
          %v728 = vld [vmem:[#allocation2 + $0x40] sm:$0xff]
          %v729 = vld [vmem:[#allocation2 + $0x48] sm:$0xff]
          %v730 = vld [vmem:[#allocation2 + $0x50] sm:$0xff]
          %v731 = vld [vmem:[#allocation2 + $0x58] sm:$0xff]
          %v732 = vld [vmem:[#allocation2 + $0x60] sm:$0xff]
          %v733 = vld [vmem:[#allocation2 + $0x68] sm:$0xff]
          %v734 = vld [vmem:[#allocation2 + $0x70] sm:$0xff]
          %v735 = vld [vmem:[#allocation2 + $0x78] sm:$0xff]
          %v736 = vld [vmem:[%s398] sm:$0x1]
          %v738 = vlaneseq
          %v739 = vshrl.u32 %v738, 7
          %v740 = vsub.s32 0, %v739
          %v741 = vrot.slane %v736, %v740
          %v743 = vadd.f32 %v720, %v741
          %v744 = vadd.f32 %v721, %v741
          %v745 = vadd.f32 %v722, %v741
          %v746 = vadd.f32 %v723, %v741
          %v747 = vadd.f32 %v724, %v741
          %v748 = vadd.f32 %v725, %v741
          %v749 = vadd.f32 %v726, %v741
          %v750 = vadd.f32 %v727, %v741
          %v751 = vadd.f32 %v728, %v741
          %v752 = vadd.f32 %v729, %v741
          %v753 = vadd.f32 %v730, %v741
          %v754 = vadd.f32 %v731, %v741
          %v755 = vadd.f32 %v732, %v741
          %v756 = vadd.f32 %v733, %v741
          %v757 = vadd.f32 %v734, %v741
          %v758 = vadd.f32 %v735, %v741
          %760 = vset.pattern.permute.xlu0 0
          %761 = vperm.xlu0 %760, %v704
          %v762 = vpop.permute.xlu0 %761
          %765 = vset.pattern.permute.xlu0 0
          %766 = vperm.xlu0 %765, %v705
          %v767 = vpop.permute.xlu0 %766
          %770 = vset.pattern.permute.xlu0 0
          %771 = vperm.xlu0 %770, %v706
          %v772 = vpop.permute.xlu0 %771
          %775 = vset.pattern.permute.xlu0 0
          %776 = vperm.xlu0 %775, %v707
          %v777 = vpop.permute.xlu0 %776
          %780 = vset.pattern.permute.xlu0 0
          %781 = vperm.xlu0 %780, %v708
          %v782 = vpop.permute.xlu0 %781
          %785 = vset.pattern.permute.xlu0 0
          %786 = vperm.xlu0 %785, %v709
          %v787 = vpop.permute.xlu0 %786
          %790 = vset.pattern.permute.xlu0 0
          %791 = vperm.xlu0 %790, %v710
          %v792 = vpop.permute.xlu0 %791
          %795 = vset.pattern.permute.xlu0 0
          %796 = vperm.xlu0 %795, %v711
          %v797 = vpop.permute.xlu0 %796
          %800 = vset.pattern.permute.xlu0 0
          %801 = vperm.xlu0 %800, %v712
          %v802 = vpop.permute.xlu0 %801
          %805 = vset.pattern.permute.xlu0 0
          %806 = vperm.xlu0 %805, %v713
          %v807 = vpop.permute.xlu0 %806
          %810 = vset.pattern.permute.xlu0 0
          %811 = vperm.xlu0 %810, %v714
          %v812 = vpop.permute.xlu0 %811
          %815 = vset.pattern.permute.xlu0 0
          %816 = vperm.xlu0 %815, %v715
          %v817 = vpop.permute.xlu0 %816
          %820 = vset.pattern.permute.xlu0 0
          %821 = vperm.xlu0 %820, %v716
          %v822 = vpop.permute.xlu0 %821
          %825 = vset.pattern.permute.xlu0 0
          %826 = vperm.xlu0 %825, %v717
          %v827 = vpop.permute.xlu0 %826
          %830 = vset.pattern.permute.xlu0 0
          %831 = vperm.xlu0 %830, %v718
          %v832 = vpop.permute.xlu0 %831
          %835 = vset.pattern.permute.xlu0 0
          %836 = vperm.xlu0 %835, %v719
          %v837 = vpop.permute.xlu0 %836
          %v839 = vmul.f32 %v743, %v762
          %v840 = vmul.f32 %v744, %v767
          %v841 = vmul.f32 %v745, %v772
          %v842 = vmul.f32 %v746, %v777
          %v843 = vmul.f32 %v747, %v782
          %v844 = vmul.f32 %v748, %v787
          %v845 = vmul.f32 %v749, %v792
          %v846 = vmul.f32 %v750, %v797
          %v847 = vmul.f32 %v751, %v802
          %v848 = vmul.f32 %v752, %v807
          %v849 = vmul.f32 %v753, %v812
          %v850 = vmul.f32 %v754, %v817
          %v851 = vmul.f32 %v755, %v822
          %v852 = vmul.f32 %v756, %v827
          %v853 = vmul.f32 %v757, %v832
          %v854 = vmul.f32 %v758, %v837
          %855 = vset.pattern.permute.xlu0 1
          %856 = vperm.xlu0 %855, %v704
          %v857 = vpop.permute.xlu0 %856
          %859 = vset.pattern.permute.xlu0 1
          %860 = vperm.xlu0 %859, %v705
          %v861 = vpop.permute.xlu0 %860
          %863 = vset.pattern.permute.xlu0 1
          %864 = vperm.xlu0 %863, %v706
          %v865 = vpop.permute.xlu0 %864
          %867 = vset.pattern.permute.xlu0 1
          %868 = vperm.xlu0 %867, %v707
          %v869 = vpop.permute.xlu0 %868
          %871 = vset.pattern.permute.xlu0 1
          %872 = vperm.xlu0 %871, %v708
          %v873 = vpop.permute.xlu0 %872
          %875 = vset.pattern.permute.xlu0 1
          %876 = vperm.xlu0 %875, %v709
          %v877 = vpop.permute.xlu0 %876
          %879 = vset.pattern.permute.xlu0 1
          %880 = vperm.xlu0 %879, %v710
          %v881 = vpop.permute.xlu0 %880
          %883 = vset.pattern.permute.xlu0 1
          %884 = vperm.xlu0 %883, %v711
          %v885 = vpop.permute.xlu0 %884
          %887 = vset.pattern.permute.xlu0 1
          %888 = vperm.xlu0 %887, %v712
          %v889 = vpop.permute.xlu0 %888
          %891 = vset.pattern.permute.xlu0 1
          %892 = vperm.xlu0 %891, %v713
          %v893 = vpop.permute.xlu0 %892
          %895 = vset.pattern.permute.xlu0 1
          %896 = vperm.xlu0 %895, %v714
          %v897 = vpop.permute.xlu0 %896
          %899 = vset.pattern.permute.xlu0 1
          %900 = vperm.xlu0 %899, %v715
          %v901 = vpop.permute.xlu0 %900
          %903 = vset.pattern.permute.xlu0 1
          %904 = vperm.xlu0 %903, %v716
          %v905 = vpop.permute.xlu0 %904
          %907 = vset.pattern.permute.xlu0 1
          %908 = vperm.xlu0 %907, %v717
          %v909 = vpop.permute.xlu0 %908
          %911 = vset.pattern.permute.xlu0 1
          %912 = vperm.xlu0 %911, %v718
          %v913 = vpop.permute.xlu0 %912
          %915 = vset.pattern.permute.xlu0 1
          %916 = vperm.xlu0 %915, %v719
          %v917 = vpop.permute.xlu0 %916
          %v919 = vadd.f32 %v839, %v857
          %v920 = vadd.f32 %v840, %v861
          %v921 = vadd.f32 %v841, %v865
          %v922 = vadd.f32 %v842, %v869
          %v923 = vadd.f32 %v843, %v873
          %v924 = vadd.f32 %v844, %v877
          %v925 = vadd.f32 %v845, %v881
          %v926 = vadd.f32 %v846, %v885
          %v927 = vadd.f32 %v847, %v889
          %v928 = vadd.f32 %v848, %v893
          %v929 = vadd.f32 %v849, %v897
          %v930 = vadd.f32 %v850, %v901
          %v931 = vadd.f32 %v851, %v905
          %v932 = vadd.f32 %v852, %v909
          %v933 = vadd.f32 %v853, %v913
          %v934 = vadd.f32 %v854, %v917
          %v935 = vmax.f32 %v919, 0.0
          %v936 = vmax.f32 %v920, 0.0
          %v937 = vmax.f32 %v921, 0.0
          %v938 = vmax.f32 %v922, 0.0
          %v939 = vmax.f32 %v923, 0.0
          %v940 = vmax.f32 %v924, 0.0
          %v941 = vmax.f32 %v925, 0.0
          %v942 = vmax.f32 %v926, 0.0
          %v943 = vmax.f32 %v927, 0.0
          %v944 = vmax.f32 %v928, 0.0
          %v945 = vmax.f32 %v929, 0.0
          %v946 = vmax.f32 %v930, 0.0
          %v947 = vmax.f32 %v931, 0.0
          %v948 = vmax.f32 %v932, 0.0
          %v949 = vmax.f32 %v933, 0.0
          %v950 = vmax.f32 %v934, 0.0
          %v951 = vpack.c.bf16 %v936, %v935
          %v952 = vpack.c.bf16 %v938, %v937
          %v953 = vpack.c.bf16 %v940, %v939
          %v954 = vpack.c.bf16 %v942, %v941
          %v955 = vpack.c.bf16 %v944, %v943
          %v956 = vpack.c.bf16 %v946, %v945
          %v957 = vpack.c.bf16 %v948, %v947
          %v958 = vpack.c.bf16 %v950, %v949
          %v967 = vunpack.c.l.b16 %v951
          %v968 = vunpack.c.h.b16 %v951
          %v969 = vunpack.c.l.b16 %v952
          %v970 = vunpack.c.h.b16 %v952
          %v971 = vunpack.c.l.b16 %v953
          %v972 = vunpack.c.h.b16 %v953
          %v973 = vunpack.c.l.b16 %v954
          %v974 = vunpack.c.h.b16 %v954
          %v975 = vunpack.c.l.b16 %v955
          %v976 = vunpack.c.h.b16 %v955
          %v977 = vunpack.c.l.b16 %v956
          %v978 = vunpack.c.h.b16 %v956
          %v979 = vunpack.c.l.b16 %v957
          %v980 = vunpack.c.h.b16 %v957
          %v981 = vunpack.c.l.b16 %v958
          %v982 = vunpack.c.h.b16 %v958
          %v983 = vpack.c.b16 %v967, %v967
          %v984 = vpack.c.b16 %v968, %v968
          %v985 = vpack.c.b16 %v969, %v969
          %v986 = vpack.c.b16 %v970, %v970
          %v987 = vpack.c.b16 %v971, %v971
          %v988 = vpack.c.b16 %v972, %v972
          %v989 = vpack.c.b16 %v973, %v973
          %v990 = vpack.c.b16 %v974, %v974
          %v991 = vpack.c.b16 %v975, %v975
          %v992 = vpack.c.b16 %v976, %v976
          %v993 = vpack.c.b16 %v977, %v977
          %v994 = vpack.c.b16 %v978, %v978
          %v995 = vpack.c.b16 %v979, %v979
          %v996 = vpack.c.b16 %v980, %v980
          %v997 = vpack.c.b16 %v981, %v981
          %v998 = vpack.c.b16 %v982, %v982
          %1015 = vst [vmem:[%s393] sm:$0xf] %v983
          %1016 = vst [vmem:[%s393 + $0x4] sm:$0xf] %v984
          %1017 = vst [vmem:[%s393 + $0x8] sm:$0xf] %v985
          %1018 = vst [vmem:[%s393 + $0xc] sm:$0xf] %v986
          %1019 = vst [vmem:[%s393 + $0x10] sm:$0xf] %v987
          %1020 = vst [vmem:[%s393 + $0x14] sm:$0xf] %v988
          %1021 = vst [vmem:[%s393 + $0x18] sm:$0xf] %v989
          %1022 = vst [vmem:[%s393 + $0x1c] sm:$0xf] %v990
          %1023 = vst [vmem:[%s393 + $0x20] sm:$0xf] %v991
          %1024 = vst [vmem:[%s393 + $0x24] sm:$0xf] %v992
          %1025 = vst [vmem:[%s393 + $0x28] sm:$0xf] %v993
          %1026 = vst [vmem:[%s393 + $0x2c] sm:$0xf] %v994
          %1027 = vst [vmem:[%s393 + $0x30] sm:$0xf] %v995
          %1028 = vst [vmem:[%s393 + $0x34] sm:$0xf] %v996
          %1029 = vst [vmem:[%s393 + $0x38] sm:$0xf] %v997
          %1030 = vst [vmem:[%s393 + $0x3c] sm:$0xf] %v998
        $region89: #{tpu_custom_call.1} parent=72 // pred_fallthru
          _
        %s1031 = sand.u32 %s158, 1
        %s1032 = scalar_lea.sflag [#allocation6], %s1031
        %s1033 = sand.u32 %s158, 1
        %s1034 = smul.addr %s1033, 64
        %s1035 = scalar_lea.vmem [#allocation7], %s1034
        // Predicated region
        $region90: #{tpu_custom_call.1} parent=72 // pred_check
          %p1036 = pneg %p168
        $region91: #{tpu_custom_call.1} parent=72 // pred_check_branch
          %1038 = sbr.rel (%p1036) target = $region93
        $region92: #{tpu_custom_call.1} parent=72 // pred_region
          %s1039 = smul.u32 16, %s26
          %s1041 = ssub.s32 1024, 1024
          %1042 = vsyncadd %s1032, %s1041
          %s1043 = smul.addr %s1039, 2
          %s1044 = sadd.s32 %s27, %s1043
          %s1045 = smul.addr %s1044, 64
          %s1046 = scalar_lea.hbm %s4, %s1045
          %s1047 = sshll.u32 %s1035, 4
          %s1048 = int_to_ptr.vmem [resolvable:$true] %s1047
          %1053 = dma.vmem_to_hbm [thread:$0]  %s1048, 1024, %s1046, %s1032, 64, 128, 4
        $region93: #{tpu_custom_call.1} parent=72 // pred_fallthru
          _
      $region73: #{tpu_custom_call.1} parent=5 // pred_fallthru
        _
      %p1054 = scmp.le.s32.totalorder 2, %s16
      // Predicated region
      $region94: #{tpu_custom_call.1} parent=5 // pred_check
        %p1055 = pneg %p1054
      $region95: #{tpu_custom_call.1} parent=5 // pred_check_branch
        %1057 = sbr.rel (%p1055) target = $region97
      $region96: #{tpu_custom_call.1} parent=5 // pred_region
        %s1058 = ssub.s32 %s16, 2
        // Predicated region
        $region98: #{tpu_custom_call.1} parent=96 // pred_check
          %p1059 = pneg %p174
        $region99: #{tpu_custom_call.1} parent=96 // pred_check_branch
          %1061 = sbr.rel (%p1059) target = $region101
        $region100: #{tpu_custom_call.1} parent=96 // pred_region
          %s1062 = sand.u32 %s159, 1
          %s1063 = scalar_lea.sflag [#allocation6], %s1062
          %s1064 = sand.u32 %s159, 1
          %s1065 = smul.addr %s1064, 64
          %s1066 = scalar_lea.vmem [#allocation7], %s1065
          %1067 = dma.done %s1063, 1024
        $region101: #{tpu_custom_call.1} parent=96 // pred_fallthru
          _
      $region97: #{tpu_custom_call.1} parent=5 // pred_fallthru
        _
    $region6: #{tpu_custom_call.1} parent=1 // loop_footer
      %s20 = sadd.s32 1, %s16
    $region7: #{tpu_custom_call.1} parent=1 // loop_footer_branch
      %15 = sbr.rel target = $region3
    $region8: #{tpu_custom_call.1} parent=1 // loop_exit
      _
    %1068 = vsyncpa [#allocation5], 1
    %s1069 = scalar_lea.sflag [#allocation5], 1
    %1070 = vsyncpa %s1069, 1
    %1071 = vsyncpa [#allocation6], 1
    %s1072 = scalar_lea.sflag [#allocation6], 1
    %1073 = vsyncpa %s1072, 1

</llo_original>
